<compile_context>
chip_gen: v7x
topology: tpu7x:2x2x1
jax: 0.10.0
libtpu: 0.0.40
codegen_flags: <defaults>
</compile_context>

<pallas_src>
import functools

import jax
import jax.numpy as jnp
import numpy as np
from jax.experimental import pallas as pl
from jax.experimental.pallas import tpu as pltpu

_NEG_BIG = -1e30  # bias for padded action columns -> exp underflows to exactly 0


def _round_up(x: int, m: int) -> int:
    return ((x + m - 1) // m) * m


def policy_kernel(x_ref, w1_ref, b1_ref, w2_ref, b2_ref, o_ref):
    # ---- fc1 + ReLU --------------------------------------------------------
    x = x_ref[...].astype(jnp.float32)       # (TB, S)
    w1 = w1_ref[...].astype(jnp.float32)     # (S, Hp)
    s = x_ref.shape[1]
    if s <= 16:
        # Tiny static K: unrolled VPU broadcast-FMAs, skip the MXU entirely.
        acc = x[:, 0:1] * w1[0:1, :]
        for k in range(1, s):
            acc = acc + x[:, k : k + 1] * w1[k : k + 1, :]
    else:
        acc = jnp.dot(x, w1, preferred_element_type=jnp.float32)
    h = jnp.maximum(acc + b1_ref[...].astype(jnp.float32), 0.0)   # (TB, Hp)

    # ---- fc2 logits on the MXU (bf16 operands by default, f32 accumulate) ---
    logits = jnp.dot(
        h.astype(w2_ref.dtype), w2_ref[...], preferred_element_type=jnp.float32
    )
    # Bias (and the -1e30 padded-column mask) added in f32 after the matmul.
    logits = logits + b2_ref[...].astype(jnp.float32)              # (TB, Ap)

    # ---- numerically stable softmax over the (padded) action dim ------------
    # Padded action columns carry a -1e30 bias, so exp(...) == 0 for them.
    m = jnp.max(logits, axis=1, keepdims=True)
    e = jnp.exp(logits - m)
    denom = jnp.sum(e, axis=1, keepdims=True)
    o_ref[...] = (e / denom).astype(o_ref.dtype)      # exact normalization


def prepare_policy_params(w1, b1, w2, b2, *, fc2_dtype=jnp.bfloat16):
    """Pad params once (at init time) to 128-lane widths; cast fc2 weights.

    w1: (S, H); b1: (1, H) or (H,); w2: (H, A); b2: (1, A) or (A,).
    Weights are stored (in, out), i.e. transposed vs PyTorch's (out, in).
    """
    S, H = w1.shape
    H2, A = w2.shape
    assert H2 == H
    Hp = _round_up(H, 128)
    Ap = _round_up(A, 128)
    w1p = jnp.pad(jnp.asarray(w1, jnp.float32), ((0, 0), (0, Hp - H)))
    b1p = jnp.pad(jnp.asarray(b1, jnp.float32).reshape(1, H), ((0, 0), (0, Hp - H)))
    w2p = jnp.pad(jnp.asarray(w2, jnp.float32),
                  ((0, Hp - H), (0, Ap - A))).astype(fc2_dtype)
    b2p = jnp.pad(jnp.asarray(b2, jnp.float32).reshape(1, A), ((0, 0), (0, Ap - A)),
                  constant_values=_NEG_BIG)
    return dict(w1=w1p, b1=b1p, w2=w2p, b2=b2p, action_dim=A)


@functools.partial(jax.jit, static_argnames=("action_dim", "block_b"))
def _policy_forward_padded(x, w1p, b1p, w2p, b2p, *, action_dim, block_b):
    B, S = x.shape
    Hp = w1p.shape[1]
    Ap = w2p.shape[1]

    # Batch tile: as large as block_b allows, but capped at ceil(B/2) (rounded
    # up to the sublane width) so the "parallel" grid has >= 2 steps and both
    # v7x TensorCores get work. Pallas masks writes of the partial last block.
    if B <= 8:
        TB = B                                        # single full block
    else:
        TB = min(block_b, _round_up(-(-B // 2), 8))
    grid = (pl.cdiv(B, TB),)

    out = pl.pallas_call(
        policy_kernel,
        out_shape=jax.ShapeDtypeStruct((B, Ap), jnp.float32),
        grid=grid,
        in_specs=[
            pl.BlockSpec((TB, S), lambda i: (i, 0)),     # x: tiled over batch
            pl.BlockSpec((S, Hp), lambda i: (0, 0)),     # weights/biases stay
            pl.BlockSpec((1, Hp), lambda i: (0, 0)),     # resident in VMEM
            pl.BlockSpec((Hp, Ap), lambda i: (0, 0)),    # (block (0,0) every
            pl.BlockSpec((1, Ap), lambda i: (0, 0)),     #  grid step)
        ],
        out_specs=pl.BlockSpec((TB, Ap), lambda i: (i, 0)),
        compiler_params=pltpu.CompilerParams(
            dimension_semantics=("parallel",),           # megacore split on v7x
            vmem_limit_bytes=48 * 1024 * 1024,           # headroom over v5e 16MiB default
        ),
    )(x, w1p, b1p, w2p, b2p)

    return out[:, :action_dim]


def policy_net_forward(x, params, *, block_b: int = 2048):
    return _policy_forward_padded(
        x, params["w1"], params["b1"], params["w2"], params["b2"],
        action_dim=params["action_dim"], block_b=block_b)


# ----------------------------- init helpers ---------------------------------
def xavier_uniform(key, fan_in, fan_out, dtype=jnp.float32):
    # matches torch.nn.init.xavier_uniform_ bound
    bound = float(np.sqrt(6.0 / (fan_in + fan_out)))
    return jax.random.uniform(key, (fan_in, fan_out), dtype, -bound, bound)


def linear_bias_init(key, fan_in, fan_out, dtype=jnp.float32):
    # matches PyTorch default Linear bias init: U(-1/sqrt(fan_in), 1/sqrt(fan_in))
    bound = float(1.0 / np.sqrt(fan_in))
    return jax.random.uniform(key, (1, fan_out), dtype, -bound, bound)


def _reference(x, w1, b1, w2, b2):
    h = jnp.maximum(x @ w1 + b1, 0.0)
    return jax.nn.softmax(h @ w2 + b2, axis=1)


if __name__ == "__main__":
    # Small shapes consistent with the module: batch=2, state_dim=4,
    # hidden_dim=32, action_dim=8.
    B, state_dim, hidden_dim, action_dim = 2, 4, 32, 8

    key = jax.random.PRNGKey(0)
    k_x, k_w1, k_b1, k_w2, k_b2, k_xl = jax.random.split(key, 6)

    x = jax.random.normal(k_x, (B, state_dim), jnp.float32)

    # Weights stored as (in, out) — transposed relative to PyTorch's (out, in).
    w1 = xavier_uniform(k_w1, state_dim, hidden_dim)
    b1 = linear_bias_init(k_b1, state_dim, hidden_dim)
    w2 = xavier_uniform(k_w2, hidden_dim, action_dim)
    b2 = linear_bias_init(k_b2, hidden_dim, action_dim)

    ref = _reference(x, w1, b1, w2, b2)

    # --- exact f32 fc2 path: matches the PyTorch module tightly --------------
    params_f32 = prepare_policy_params(w1, b1, w2, b2, fc2_dtype=jnp.float32)
    out_f32 = jax.block_until_ready(policy_net_forward(x, params_f32))
    np.testing.assert_allclose(np.asarray(out_f32), np.asarray(ref),
                               rtol=1e-4, atol=1e-6)
    np.testing.assert_allclose(np.asarray(out_f32).sum(axis=1), np.ones(B), atol=1e-5)

    # --- default bf16-fc2 path (native MXU dtype on v6e/v7x) -----------------
    params = prepare_policy_params(w1, b1, w2, b2)
    out_bf = jax.block_until_ready(policy_net_forward(x, params))
    np.testing.assert_allclose(np.asarray(out_bf), np.asarray(ref),
                               rtol=2e-2, atol=2e-3)
    np.testing.assert_allclose(np.asarray(out_bf).sum(axis=1), np.ones(B), atol=1e-3)

    # --- larger, non-tile-multiple batch: partial last block + 2-step grid ---
    B2 = 1000
    x_big = jax.random.normal(k_xl, (B2, state_dim), jnp.float32)
    ref_big = _reference(x_big, w1, b1, w2, b2)
    out_big = jax.block_until_ready(policy_net_forward(x_big, params))
    np.testing.assert_allclose(np.asarray(out_big), np.asarray(ref_big),
                               rtol=2e-2, atol=2e-3)
    np.testing.assert_allclose(np.asarray(out_big).sum(axis=1), np.ones(B2), atol=1e-3)

    print("KERNEL_OK")
</pallas_src>

<mosaic_0001>
module attributes {stable_mosaic.version = 11 : i64} {
  func.func @policy_kernel(%arg0: i32, %arg1: memref<2x4xf32, #tpu.memory_space<vmem>>, %arg2: memref<4x128xf32, #tpu.memory_space<vmem>>, %arg3: memref<1x128xf32, #tpu.memory_space<vmem>>, %arg4: memref<128x128xf32, #tpu.memory_space<vmem>>, %arg5: memref<1x128xf32, #tpu.memory_space<vmem>>, %arg6: memref<2x128xf32, #tpu.memory_space<vmem>>) attributes {dimension_semantics = [#tpu.dimension_semantics<parallel>], iteration_bounds = array<i64: 1>, scalar_prefetch = 0 : i64, scratch_operands = 0 : i64, tpu.core_type = #tpu.core_type<tc>, window_params = [{transform_indices = @transform_0, window_bounds = array<i64: 2, 4>}, {pipeline_mode = #tpu.pipeline_mode<synchronous>, transform_indices = @transform_1, window_bounds = array<i64: 4, 128>}, {pipeline_mode = #tpu.pipeline_mode<synchronous>, transform_indices = @transform_2, window_bounds = array<i64: 1, 128>}, {pipeline_mode = #tpu.pipeline_mode<synchronous>, transform_indices = @transform_3, window_bounds = array<i64: 128, 128>}, {pipeline_mode = #tpu.pipeline_mode<synchronous>, transform_indices = @transform_4, window_bounds = array<i64: 1, 128>}, {transform_indices = @transform_5, window_bounds = array<i64: 2, 128>}]} {
    %c0 = arith.constant 0 : index
    %c0_0 = arith.constant 0 : index
    %0 = vector.load %arg1[%c0, %c0_0] : memref<2x4xf32, #tpu.memory_space<vmem>>, vector<2x4xf32>
    %c0_1 = arith.constant 0 : index
    %c0_2 = arith.constant 0 : index
    %1 = vector.load %arg2[%c0_1, %c0_2] : memref<4x128xf32, #tpu.memory_space<vmem>>, vector<4x128xf32>
    %2 = vector.extract_strided_slice %0 {offsets = [0, 0], sizes = [2, 1], strides = [1, 1]} : vector<2x4xf32> to vector<2x1xf32>
    %3 = vector.extract_strided_slice %1 {offsets = [0, 0], sizes = [1, 128], strides = [1, 1]} : vector<4x128xf32> to vector<1x128xf32>
    %4 = vector.broadcast %2 : vector<2x1xf32> to vector<2x128xf32>
    %5 = vector.broadcast %3 : vector<1x128xf32> to vector<2x128xf32>
    %6 = arith.mulf %4, %5 : vector<2x128xf32>
    %7 = vector.extract_strided_slice %0 {offsets = [0, 1], sizes = [2, 1], strides = [1, 1]} : vector<2x4xf32> to vector<2x1xf32>
    %8 = vector.extract_strided_slice %1 {offsets = [1, 0], sizes = [1, 128], strides = [1, 1]} : vector<4x128xf32> to vector<1x128xf32>
    %9 = vector.broadcast %7 : vector<2x1xf32> to vector<2x128xf32>
    %10 = vector.broadcast %8 : vector<1x128xf32> to vector<2x128xf32>
    %11 = arith.mulf %9, %10 : vector<2x128xf32>
    %12 = arith.addf %6, %11 : vector<2x128xf32>
    %13 = vector.extract_strided_slice %0 {offsets = [0, 2], sizes = [2, 1], strides = [1, 1]} : vector<2x4xf32> to vector<2x1xf32>
    %14 = vector.extract_strided_slice %1 {offsets = [2, 0], sizes = [1, 128], strides = [1, 1]} : vector<4x128xf32> to vector<1x128xf32>
    %15 = vector.broadcast %13 : vector<2x1xf32> to vector<2x128xf32>
    %16 = vector.broadcast %14 : vector<1x128xf32> to vector<2x128xf32>
    %17 = arith.mulf %15, %16 : vector<2x128xf32>
    %18 = arith.addf %12, %17 : vector<2x128xf32>
    %19 = vector.extract_strided_slice %0 {offsets = [0, 3], sizes = [2, 1], strides = [1, 1]} : vector<2x4xf32> to vector<2x1xf32>
    %20 = vector.extract_strided_slice %1 {offsets = [3, 0], sizes = [1, 128], strides = [1, 1]} : vector<4x128xf32> to vector<1x128xf32>
    %21 = vector.broadcast %19 : vector<2x1xf32> to vector<2x128xf32>
    %22 = vector.broadcast %20 : vector<1x128xf32> to vector<2x128xf32>
    %23 = arith.mulf %21, %22 : vector<2x128xf32>
    %24 = arith.addf %18, %23 : vector<2x128xf32>
    %c0_3 = arith.constant 0 : index
    %c0_4 = arith.constant 0 : index
    %25 = vector.load %arg3[%c0_3, %c0_4] : memref<1x128xf32, #tpu.memory_space<vmem>>, vector<1x128xf32>
    %26 = vector.broadcast %25 : vector<1x128xf32> to vector<2x128xf32>
    %27 = arith.addf %24, %26 : vector<2x128xf32>
    %cst = arith.constant 0.000000e+00 : f32
    %28 = vector.broadcast %cst : f32 to vector<2x128xf32>
    %29 = arith.maximumf %27, %28 : vector<2x128xf32>
    %c0_5 = arith.constant 0 : index
    %c0_6 = arith.constant 0 : index
    %30 = vector.load %arg4[%c0_5, %c0_6] : memref<128x128xf32, #tpu.memory_space<vmem>>, vector<128x128xf32>
    %cst_7 = arith.constant dense<0.000000e+00> : vector<2x128xf32>
    %31 = tpu.matmul %29, %30, %cst_7 {dimension_numbers = #tpu.dot_dimension_numbers<[1], [0], [0], [1], [0, 0, 1, 1], [], []>} : vector<2x128xf32>, vector<128x128xf32>, vector<2x128xf32> -> vector<2x128xf32>
    %c0_8 = arith.constant 0 : index
    %c0_9 = arith.constant 0 : index
    %32 = vector.load %arg5[%c0_8, %c0_9] : memref<1x128xf32, #tpu.memory_space<vmem>>, vector<1x128xf32>
    %33 = vector.broadcast %32 : vector<1x128xf32> to vector<2x128xf32>
    %34 = arith.addf %31, %33 : vector<2x128xf32>
    %cst_10 = arith.constant dense<0xFF800000> : vector<2xf32>
    %35 = vector.multi_reduction <maximumf>, %34, %cst_10 [1] : vector<2x128xf32> to vector<2xf32>
    %36 = vector.shape_cast %35 : vector<2xf32> to vector<2x1xf32>
    %37 = vector.broadcast %36 : vector<2x1xf32> to vector<2x128xf32>
    %38 = arith.subf %34, %37 : vector<2x128xf32>
    %39 = math.exp %38 : vector<2x128xf32>
    %cst_11 = arith.constant dense<0.000000e+00> : vector<2xf32>
    %40 = vector.multi_reduction <add>, %39, %cst_11 [1] : vector<2x128xf32> to vector<2xf32>
    %41 = vector.shape_cast %40 : vector<2xf32> to vector<2x1xf32>
    %42 = vector.broadcast %41 : vector<2x1xf32> to vector<2x128xf32>
    %43 = arith.divf %39, %42 : vector<2x128xf32>
    %c0_12 = arith.constant 0 : index
    %c0_13 = arith.constant 0 : index
    %44 = vector.load %arg6[%c0_12, %c0_13] : memref<2x128xf32, #tpu.memory_space<vmem>>, vector<2x128xf32>
    tpu.vector_store %arg6[%c0_12, %c0_13], %43 {strides = array<i32>} : memref<2x128xf32, #tpu.memory_space<vmem>>, vector<2x128xf32>,
    return
  }
  func.func @transform_0(%arg0: i32) -> (i32, i32) {
    %c0_i32 = arith.constant 0 : i32
    %c0_i32_0 = arith.constant 0 : i32
    return %arg0, %c0_i32 : i32, i32
  }
  func.func @transform_1(%arg0: i32) -> (i32, i32) {
    %c0_i32 = arith.constant 0 : i32
    %c0_i32_0 = arith.constant 0 : i32
    %c0_i32_1 = arith.constant 0 : i32
    return %c0_i32, %c0_i32_0 : i32, i32
  }
  func.func @transform_2(%arg0: i32) -> (i32, i32) {
    %c0_i32 = arith.constant 0 : i32
    %c0_i32_0 = arith.constant 0 : i32
    %c0_i32_1 = arith.constant 0 : i32
    return %c0_i32, %c0_i32_0 : i32, i32
  }
  func.func @transform_3(%arg0: i32) -> (i32, i32) {
    %c0_i32 = arith.constant 0 : i32
    %c0_i32_0 = arith.constant 0 : i32
    %c0_i32_1 = arith.constant 0 : i32
    return %c0_i32, %c0_i32_0 : i32, i32
  }
  func.func @transform_4(%arg0: i32) -> (i32, i32) {
    %c0_i32 = arith.constant 0 : i32
    %c0_i32_0 = arith.constant 0 : i32
    %c0_i32_1 = arith.constant 0 : i32
    return %c0_i32, %c0_i32_0 : i32, i32
  }
  func.func @transform_5(%arg0: i32) -> (i32, i32) {
    %c0_i32 = arith.constant 0 : i32
    %c0_i32_0 = arith.constant 0 : i32
    return %arg0, %c0_i32 : i32, i32
  }
}

</mosaic_0001>

<llo_original>
// kernel: _policy_forward_padded.1
$region0: #{_policy_forward_padded.1}
  #allocation0 [shape = 'u32[]', space=smem, size = 0x4, offset = 0x4, fixed_abs, tag = 'smem constant byte address 0x4 - core index']
  #allocation1 [shape = 'u32[144,128]{1,0:T(1,128)}', space=vmem, size = 0x12000, scoped, tag = 'internal scratch']
  %s0 = inlined_call_operand.hbm [shape: f32[2,4], index: 0, kind: input, shape index: {}]
  %s1 = inlined_call_operand.hbm [shape: f32[4,128], index: 1, kind: input, shape index: {}]
  %s2 = inlined_call_operand.vmem [shape: f32[1,128], index: 2, kind: input, shape index: {}]
  %s3 = inlined_call_operand.hbm [shape: f32[128,128], index: 3, kind: input, shape index: {}]
  %s4 = inlined_call_operand.vmem [shape: f32[1,128], index: 4, kind: input, shape index: {}]
  %s5 = inlined_call_operand.hbm [shape: f32[2,128], index: 5, kind: output, shape index: {}]
  %s6 = sld [smem:[#allocation0]]
  $region42: #{_policy_forward_padded.1} parent=0
    _
  %s8 = ssub.s32 1, %s6
  %s9 = scalar_select 0, %s8, %s6
  $region1: #{_policy_forward_padded.1} parent=0
    #allocation2 [shape = 'u8[1024]{0}', space=vmem, size = 0x400, scoped, tag = 'input window, operand 0, single buffered']
    #allocation3 [shape = 's32[1]{0}', space=sflag, size = 0x4, scoped, tag = 'scoped memory for _policy_forward_padded.1']
    #allocation4 [shape = 's32[1]{0}', space=sflag, size = 0x4, scoped, tag = 'scoped memory for _policy_forward_padded.1']
    #allocation5 [shape = 'u8[2048]{0}', space=vmem, size = 0x800, scoped, tag = 'input window, operand 1, single buffered']
    #allocation6 [shape = 's32[1]{0}', space=sflag, size = 0x4, scoped, tag = 'scoped memory for _policy_forward_padded.1']
    #allocation7 [shape = 'u8[65536]{0}', space=vmem, size = 0x10000, scoped, tag = 'input window, operand 3, single buffered']
    #allocation8 [shape = 'u8[1024]{0}', space=vmem, size = 0x400, scoped, tag = 'output window, operand 0, single buffered']
    %10 = vsyncpa [#allocation3], 0
    %11 = vsyncpa [#allocation6], 0
    %12 = vsyncpa [#allocation4], 0
    // Predicated region
    $region2: #{_policy_forward_padded.1} parent=1 // pred_check
      _
    $region3: #{_policy_forward_padded.1} parent=1 // pred_check_branch
      %14 = sbr.rel (0) target = $region5
    $region4: #{_policy_forward_padded.1} parent=1 // pred_region
      %s16 = ssub.s32 32, 32
      %17 = vsyncadd [#allocation3], %s16
      %s19 = sshll.u32 [#allocation2], 4
      %s20 = int_to_ptr.vmem [resolvable:$true] %s19
      %22 = dma.hbm_to_vmem [thread:$0]  %s0, 32, %s20, [#allocation3]
    $region5: #{_policy_forward_padded.1} parent=1 // pred_fallthru
      _
    // Predicated region
    $region6: #{_policy_forward_padded.1} parent=1 // pred_check
      _
    $region7: #{_policy_forward_padded.1} parent=1 // pred_check_branch
      %24 = sbr.rel (0) target = $region9
    $region8: #{_policy_forward_padded.1} parent=1 // pred_region
      %s26 = ssub.s32 64, 64
      %27 = vsyncadd [#allocation6], %s26
      %s29 = sshll.u32 [#allocation5], 4
      %s30 = int_to_ptr.vmem [resolvable:$true] %s29
      %32 = dma.hbm_to_vmem [thread:$0]  %s1, 64, %s30, [#allocation6]
    $region9: #{_policy_forward_padded.1} parent=1 // pred_fallthru
      _
    // Predicated region
    $region10: #{_policy_forward_padded.1} parent=1 // pred_check
      _
    $region11: #{_policy_forward_padded.1} parent=1 // pred_check_branch
      %34 = sbr.rel (0) target = $region13
    $region12: #{_policy_forward_padded.1} parent=1 // pred_region
      _
    $region13: #{_policy_forward_padded.1} parent=1 // pred_fallthru
      _
    // Predicated region
    $region14: #{_policy_forward_padded.1} parent=1 // pred_check
      _
    $region15: #{_policy_forward_padded.1} parent=1 // pred_check_branch
      %36 = sbr.rel (0) target = $region17
    $region16: #{_policy_forward_padded.1} parent=1 // pred_region
      %s38 = ssub.s32 2048, 2048
      %39 = vsyncadd [#allocation6], %s38
      %s40 = sshll.u32 [#allocation7], 4
      %s41 = int_to_ptr.vmem [resolvable:$true] %s40
      %46 = dma.hbm_to_vmem [thread:$0]  %s3, 2048, %s41, [#allocation6], 128, 128, 8
    $region17: #{_policy_forward_padded.1} parent=1 // pred_fallthru
      _
    // Predicated region
    $region18: #{_policy_forward_padded.1} parent=1 // pred_check
      _
    $region19: #{_policy_forward_padded.1} parent=1 // pred_check_branch
      %48 = sbr.rel (0) target = $region21
    $region20: #{_policy_forward_padded.1} parent=1 // pred_region
      _
    $region21: #{_policy_forward_padded.1} parent=1 // pred_fallthru
      _
    // Predicated region
    $region22: #{_policy_forward_padded.1} parent=1 // pred_check
      _
    $region23: #{_policy_forward_padded.1} parent=1 // pred_check_branch
      %50 = sbr.rel (0) target = $region25
    $region24: #{_policy_forward_padded.1} parent=1 // pred_region
      %51 = dma.done [#allocation3], 32
    $region25: #{_policy_forward_padded.1} parent=1 // pred_fallthru
      _
    // Predicated region
    $region26: #{_policy_forward_padded.1} parent=1 // pred_check
      _
    $region27: #{_policy_forward_padded.1} parent=1 // pred_check_branch
      %53 = sbr.rel (0) target = $region29
    $region28: #{_policy_forward_padded.1} parent=1 // pred_region
      %54 = dma.done [#allocation6], 64
    $region29: #{_policy_forward_padded.1} parent=1 // pred_fallthru
      _
    // Predicated region
    $region30: #{_policy_forward_padded.1} parent=1 // pred_check
      _
    $region31: #{_policy_forward_padded.1} parent=1 // pred_check_branch
      %56 = sbr.rel (0) target = $region33
    $region32: #{_policy_forward_padded.1} parent=1 // pred_region
      %57 = dma.done [#allocation6], 2048
    $region33: #{_policy_forward_padded.1} parent=1 // pred_fallthru
      _
    %v58 = vld [vmem:[#allocation2] sm:$0x3]
    %v59 = vld [vmem:[#allocation5] sm:$0xf]
    %61 = vset.pattern.permute.xlu0 0
    %62 = vperm.xlu0 %61, %v58
    %v63 = vpop.permute.xlu0 %62
    %v65 = vlaneseq
    %v66 = vshrl.u32 %v65, 7
    %v67 = vsub.s32 0, %v66
    %v68 = vrot.slane %v59, %v67
    %v69 = vmul.f32 %v63, %v68
    %70 = vset.pattern.permute.xlu0 1
    %71 = vperm.xlu0 %70, %v58
    %v72 = vpop.permute.xlu0 %71
    %v74 = vlaneseq
    %v75 = vshrl.u32 %v74, 7
    %v76 = vsub.s32 1, %v75
    %v77 = vrot.slane %v59, %v76
    %v78 = vmul.f32 %v72, %v77
    %v79 = vadd.f32 %v69, %v78
    %80 = vset.pattern.permute.xlu0 2
    %81 = vperm.xlu0 %80, %v58
    %v82 = vpop.permute.xlu0 %81
    %v84 = vlaneseq
    %v85 = vshrl.u32 %v84, 7
    %v86 = vsub.s32 2, %v85
    %v87 = vrot.slane %v59, %v86
    %v88 = vmul.f32 %v82, %v87
    %v89 = vadd.f32 %v79, %v88
    %90 = vset.pattern.permute.xlu0 3
    %91 = vperm.xlu0 %90, %v58
    %v92 = vpop.permute.xlu0 %91
    %v94 = vlaneseq
    %v95 = vshrl.u32 %v94, 7
    %v96 = vsub.s32 3, %v95
    %v97 = vrot.slane %v59, %v96
    %v98 = vmul.f32 %v92, %v97
    %v99 = vadd.f32 %v89, %v98
    %v100 = vld [vmem:[%s2] sm:$0x1]
    %v102 = vlaneseq
    %v103 = vshrl.u32 %v102, 7
    %v104 = vsub.s32 0, %v103
    %v105 = vrot.slane %v100, %v104
    %v107 = vadd.f32 %v99, %v105
    %v108 = vmax.f32 %v107, 0.0
    %v109 = vld [vmem:[#allocation7] sm:$0xff]
    %v110 = vld [vmem:[#allocation7 + $0x8] sm:$0xff]
    %v111 = vld [vmem:[#allocation7 + $0x10] sm:$0xff]
    %v112 = vld [vmem:[#allocation7 + $0x18] sm:$0xff]
    %v113 = vld [vmem:[#allocation7 + $0x20] sm:$0xff]
    %v114 = vld [vmem:[#allocation7 + $0x28] sm:$0xff]
    %v115 = vld [vmem:[#allocation7 + $0x30] sm:$0xff]
    %v116 = vld [vmem:[#allocation7 + $0x38] sm:$0xff]
    %v117 = vld [vmem:[#allocation7 + $0x40] sm:$0xff]
    %v118 = vld [vmem:[#allocation7 + $0x48] sm:$0xff]
    %v119 = vld [vmem:[#allocation7 + $0x50] sm:$0xff]
    %v120 = vld [vmem:[#allocation7 + $0x58] sm:$0xff]
    %v121 = vld [vmem:[#allocation7 + $0x60] sm:$0xff]
    %v122 = vld [vmem:[#allocation7 + $0x68] sm:$0xff]
    %v123 = vld [vmem:[#allocation7 + $0x70] sm:$0xff]
    %v124 = vld [vmem:[#allocation7 + $0x78] sm:$0xff]
    %v125 = vld [vmem:[%s4] sm:$0x1]
    %v127 = vlaneseq
    %v128 = vshrl.u32 %v127, 7
    %v129 = vsub.s32 0, %v128
    %v130 = vrot.slane %v125, %v129
    %132 = vmatprep.subr.mxu0 0.0
    %133 = vmatpush1.msra.mxu0 %v109
    %134 = vmatprep.subr.mxu0 0.0
    %135 = vmatpush1.msra.mxu0 %v110
    %136 = vmatprep.subr.mxu0 0.0
    %137 = vmatpush1.msra.mxu0 %v111
    %138 = vmatprep.subr.mxu0 0.0
    %139 = vmatpush1.msra.mxu0 %v112
    %140 = vmatprep.subr.mxu0 0.0
    %141 = vmatpush1.msra.mxu0 %v113
    %142 = vmatprep.subr.mxu0 0.0
    %143 = vmatpush1.msra.mxu0 %v114
    %144 = vmatprep.subr.mxu0 0.0
    %145 = vmatpush1.msra.mxu0 %v115
    %146 = vmatprep.subr.mxu0 0.0
    %147 = vmatpush1.msra.mxu0 %v116
    %148 = vmatprep.subr.mxu0 0.0
    %149 = vmatpush1.msra.mxu0 %v117
    %150 = vmatprep.subr.mxu0 0.0
    %151 = vmatpush1.msra.mxu0 %v118
    %152 = vmatprep.subr.mxu0 0.0
    %153 = vmatpush1.msra.mxu0 %v119
    %154 = vmatprep.subr.mxu0 0.0
    %155 = vmatpush1.msra.mxu0 %v120
    %156 = vmatprep.subr.mxu0 0.0
    %157 = vmatpush1.msra.mxu0 %v121
    %158 = vmatprep.subr.mxu0 0.0
    %159 = vmatpush1.msra.mxu0 %v122
    %160 = vmatprep.subr.mxu0 0.0
    %161 = vmatpush1.msra.mxu0 %v123
    %162 = vmatprep.subr.mxu0 0.0
    %163 = vmatpush1.msra.mxu0 %v124
    %164 = vmatprep.subr.mxu0 0.0
    %165 = vmatpush1.msra.mxu0 0.0
    %166 = vmatprep.subr.mxu0 0.0
    %167 = vmatpush1.msra.mxu0 0.0
    %168 = vmatprep.subr.mxu0 0.0
    %169 = vmatpush1.msra.mxu0 0.0
    %170 = vmatprep.subr.mxu0 0.0
    %171 = vmatpush1.msra.mxu0 0.0
    %172 = vmatprep.subr.mxu0 0.0
    %173 = vmatpush1.msra.mxu0 0.0
    %174 = vmatprep.subr.mxu0 0.0
    %175 = vmatpush1.msra.mxu0 0.0
    %176 = vmatprep.subr.mxu0 0.0
    %177 = vmatpush1.msra.mxu0 0.0
    %178 = vmatprep.subr.mxu0 0.0
    %179 = vmatpush1.msra.mxu0 0.0
    %180 = vmatprep.subr.mxu0 0.0
    %181 = vmatpush1.msra.mxu0 0.0
    %182 = vmatprep.subr.mxu0 0.0
    %183 = vmatpush1.msra.mxu0 0.0
    %184 = vmatprep.subr.mxu0 0.0
    %185 = vmatpush1.msra.mxu0 0.0
    %186 = vmatprep.subr.mxu0 0.0
    %187 = vmatpush1.msra.mxu0 0.0
    %188 = vmatprep.subr.mxu0 0.0
    %189 = vmatpush1.msra.mxu0 0.0
    %190 = vmatprep.subr.mxu0 0.0
    %191 = vmatpush1.msra.mxu0 0.0
    %192 = vmatprep.subr.mxu0 0.0
    %193 = vmatpush1.msra.mxu0 0.0
    %194 = vmatprep.subr.mxu0 0.0
    %195 = vmatpush1.msra.mxu0 0.0
    %196 = vmatprep.mubr.f32.mxu0 0.0
    %197 = vmatmul.mubr.f32.gmra.mrb[0].mxu0 %v108
    %v198 = vpop.f32.mrb[0].mxu0
    %v199 = vadd.f32 %v130, %v198
    %v200 = vpop.f32.mrb[0].mxu0
    %201 = vdwg.mxu0
    %vm202 = vcmask 1041408
    %v203 = vsel %vm202, %v199, -inf
    %204 = vmax.xlane.f32.xlu0 %v203
    %v205 = vpop.xlane.xlu0 %204
    %v206 = vsub.f32 %v199, %v205
    %v207 = vmul.f32 %v206, 1.442695
    %v208 = vpow.pop %v207
    %v209 = vsel %vm202, %v208, 0.0
    %210 = vadd.xlane.f32.xlu0 %v209
    %v211 = vpop.xlane.xlu0 %210
    %v212 = vrcp.pop %v211
    %v213 = vmul.f32 %v208, %v212
    %214 = vst [vmem:[#allocation8] sm:$0x3] %v213
    // Predicated region
    $region34: #{_policy_forward_padded.1} parent=1 // pred_check
      _
    $region35: #{_policy_forward_padded.1} parent=1 // pred_check_branch
      %216 = sbr.rel (0) target = $region37
    $region36: #{_policy_forward_padded.1} parent=1 // pred_region
      %s218 = ssub.s32 32, 32
      %219 = vsyncadd [#allocation4], %s218
      %s221 = sshll.u32 [#allocation8], 4
      %s222 = int_to_ptr.vmem [resolvable:$true] %s221
      %224 = dma.vmem_to_hbm [thread:$0]  %s222, 32, %s5, [#allocation4]
    $region37: #{_policy_forward_padded.1} parent=1 // pred_fallthru
      _
    // Predicated region
    $region38: #{_policy_forward_padded.1} parent=1 // pred_check
      _
    $region39: #{_policy_forward_padded.1} parent=1 // pred_check_branch
      %226 = sbr.rel (0) target = $region41
    $region40: #{_policy_forward_padded.1} parent=1 // pred_region
      %227 = dma.done [#allocation4], 32
    $region41: #{_policy_forward_padded.1} parent=1 // pred_fallthru
      _
    %228 = vsyncpa [#allocation3], 1
    %229 = vsyncpa [#allocation6], 1
    %230 = vsyncpa [#allocation4], 1

</llo_original>
